<compile_context>
chip_gen: v7x
topology: tpu7x:2x2x1
jax: 0.10.0
libtpu: 0.0.40
codegen_flags: <defaults>
</compile_context>

<pallas_src>
import functools

import jax
import jax.numpy as jnp
from jax.experimental import pallas as pl
from jax.experimental.pallas import tpu as pltpu


def _round_up(x, m):
    return ((x + m - 1) // m) * m


def _neumf_kernel(num_fc, *refs):
    """refs = (u_mlp, i_mlp, u_mf, i_mf,
               w0_user, w0_item, b0, [w_k, b_k]*(num_fc-1),
               wa_mlp, wa_mf, b_aff, out).

    All activations are [feature, batch_tile]; batch rides the lane axis.
    """
    it = iter(refs)
    u_mlp = next(it)[...]                        # bf16 [d_mlp, TB]
    i_mlp = next(it)[...]                        # bf16 [d_mlp, TB]
    u_mf = next(it)[...].astype(jnp.float32)     # f32  [d_mf, TB]
    i_mf = next(it)[...].astype(jnp.float32)     # f32  [d_mf, TB]

    # First FC layer: torch.cat([u, i], -1) folded into a split-K matmul.
    w0_u = next(it)[...]                         # bf16 [h0, d_mlp]
    w0_i = next(it)[...]                         # bf16 [h0, d_mlp]
    b0 = next(it)[...]                           # f32  [h0, 1]
    x = (jnp.dot(w0_u, u_mlp, preferred_element_type=jnp.float32)
         + jnp.dot(w0_i, i_mlp, preferred_element_type=jnp.float32)
         + b0)
    x = jnp.maximum(x, 0.0)

    # Remaining MLP tower: Linear -> ReLU per layer.
    for _ in range(num_fc - 1):
        w = next(it)[...]                        # bf16 [out, in]
        b = next(it)[...]                        # f32  [out, 1]
        x = jnp.dot(w, x.astype(jnp.bfloat16),
                    preferred_element_type=jnp.float32) + b
        x = jnp.maximum(x, 0.0)

    wa_mlp = next(it)[...]                       # bf16 [1, h_last]
    wa_mf = next(it)[...]                        # bf16 [1, d_mf]
    b_aff = next(it)[...]                        # f32  [1, 1]
    out_ref = next(it)                           # f32  [1, TB]

    mf_vec = u_mf * i_mf                         # GMF branch, f32 elementwise
    # Final affine: torch.cat([x, mf_vec], -1) folded into a split-K matmul.
    logits = (jnp.dot(wa_mlp, x.astype(jnp.bfloat16),
                      preferred_element_type=jnp.float32)
              + jnp.dot(wa_mf, mf_vec.astype(jnp.bfloat16),
                        preferred_element_type=jnp.float32)
              + b_aff)
    # sigmoid: exp + approximate reciprocal both go to the EUP slot.
    out_ref[...] = pl.reciprocal(1.0 + jnp.exp(-logits), approx=True)


def neumf_forward(user_indices, item_indices, params, *, max_tile_batch=1024):
    """Pure-function NeuMF forward. Returns rating of shape [batch]."""
    f32, bf16 = jnp.float32, jnp.bfloat16
    d_mlp = params["emb_user_mlp"].shape[1]
    d_mf = params["emb_user_mf"].shape[1]
    fc = params["fc"]
    h_last = fc[-1][0].shape[0]

    # --- glue: embedding gathers, bf16 storage, transpose to [feature, batch].
    # TODO(synk): fuse the gathers into the kernel (scalar-prefetched indices +
    # manual DMA from HBM tables) to avoid materializing the gathered rows in HBM;
    # kept in XLA glue here because per-row DMAs are only 16-64 B payloads at
    # these embedding widths (descriptor-bound).
    u_mlp = params["emb_user_mlp"].astype(bf16)[user_indices].T    # [d_mlp, B]
    i_mlp = params["emb_item_mlp"].astype(bf16)[item_indices].T
    u_mf = params["emb_user_mf"].astype(bf16)[user_indices].T      # [d_mf, B]
    i_mf = params["emb_item_mf"].astype(bf16)[item_indices].T

    batch = user_indices.shape[0]
    tb = min(max_tile_batch, _round_up(batch, 128))   # lane-aligned batch tile
    bp = _round_up(batch, tb)                         # padded batch
    pad = bp - batch
    tiled = [u_mlp, i_mlp, u_mf, i_mf]
    if pad:
        tiled = [jnp.pad(a, ((0, 0), (0, pad))) for a in tiled]

    # Weights stay in torch [out, in] layout because the kernel computes W @ X.
    w0, b0 = fc[0]
    resident = [w0[:, :d_mlp].astype(bf16),           # W0 split-K: user half
                w0[:, d_mlp:].astype(bf16),           # W0 split-K: item half
                b0.reshape(-1, 1).astype(f32)]
    for w, b in fc[1:]:
        resident += [w.astype(bf16), b.reshape(-1, 1).astype(f32)]
    wa = params["affine_w"]
    resident += [wa[:, :h_last].astype(bf16),         # affine split-K: MLP half
                 wa[:, h_last:].astype(bf16),         # affine split-K: MF half
                 params["affine_b"].reshape(1, 1).astype(f32)]

    args = tiled + resident
    in_specs = ([pl.BlockSpec((a.shape[0], tb), lambda i: (0, i)) for a in tiled]
                + [pl.BlockSpec(a.shape, lambda i: (0, 0)) for a in resident])

    # Advisory cost estimate for the XLA scheduler around the custom call.
    macs = w0.shape[0] * w0.shape[1]
    for w, _ in fc[1:]:
        macs += w.shape[0] * w.shape[1]
    macs += h_last + d_mf
    flops = 2 * bp * macs + bp * d_mf
    bytes_accessed = sum(int(a.nbytes) for a in args) + 4 * bp

    out = pl.pallas_call(
        functools.partial(_neumf_kernel, len(fc)),
        out_shape=jax.ShapeDtypeStruct((1, bp), f32),
        grid=(bp // tb,),
        in_specs=in_specs,
        out_specs=pl.BlockSpec((1, tb), lambda i: (0, i)),
        compiler_params=pltpu.CompilerParams(
            dimension_semantics=("parallel",),        # megacore-shardable batch
            vmem_limit_bytes=32 * 1024 * 1024,
        ),
        cost_estimate=pl.CostEstimate(
            flops=flops, transcendentals=2 * bp, bytes_accessed=bytes_accessed),
    )(*args)
    return out.reshape(-1)[:batch]                    # rating.view(-1)


def _init_params(key, num_users, num_items, d_mf, d_mlp, layers):
    ks = jax.random.split(key, 6 + 2 * (len(layers) - 1))
    ki = iter(ks)
    params = {
        "emb_user_mlp": jax.random.normal(next(ki), (num_users, d_mlp), jnp.float32) * 0.1,
        "emb_item_mlp": jax.random.normal(next(ki), (num_items, d_mlp), jnp.float32) * 0.1,
        "emb_user_mf": jax.random.normal(next(ki), (num_users, d_mf), jnp.float32) * 0.1,
        "emb_item_mf": jax.random.normal(next(ki), (num_items, d_mf), jnp.float32) * 0.1,
        "fc": [],
    }
    for in_sz, out_sz in zip(layers[:-1], layers[1:]):
        w = jax.random.normal(next(ki), (out_sz, in_sz), jnp.float32) * (1.0 / jnp.sqrt(in_sz))
        b = jax.random.normal(next(ki), (out_sz,), jnp.float32) * 0.01
        params["fc"].append((w, b))
    params["affine_w"] = jax.random.normal(next(ki), (1, layers[-1] + d_mf), jnp.float32) * 0.1
    params["affine_b"] = jax.random.normal(next(ki), (1,), jnp.float32) * 0.01
    return params


def _reference_forward(user_indices, item_indices, params):
    """Pure-JAX f32 reference mirroring the PyTorch forward."""
    u_mlp = params["emb_user_mlp"][user_indices]
    i_mlp = params["emb_item_mlp"][item_indices]
    u_mf = params["emb_user_mf"][user_indices]
    i_mf = params["emb_item_mf"][item_indices]
    x = jnp.concatenate([u_mlp, i_mlp], axis=-1)
    mf = u_mf * i_mf
    for w, b in params["fc"]:
        x = jnp.maximum(x @ w.T + b, 0.0)
    vec = jnp.concatenate([x, mf], axis=-1)
    logits = vec @ params["affine_w"].T + params["affine_b"]
    return jax.nn.sigmoid(logits).reshape(-1)


if __name__ == "__main__":
    # Small NeuMF config: layers[0] must equal 2 * latent_dim_mlp.
    num_users, num_items = 32, 48
    latent_dim_mf, latent_dim_mlp = 8, 8
    layers = [16, 32, 16, 8]
    batch = 8

    key = jax.random.PRNGKey(0)
    pkey, ukey, ikey = jax.random.split(key, 3)
    params = _init_params(pkey, num_users, num_items, latent_dim_mf, latent_dim_mlp, layers)

    user_idx = jax.random.randint(ukey, (batch,), 0, num_users, dtype=jnp.int32)
    item_idx = jax.random.randint(ikey, (batch,), 0, num_items, dtype=jnp.int32)

    rating = neumf_forward(user_idx, item_idx, params)
    rating = jax.block_until_ready(rating)

    ref = _reference_forward(user_idx, item_idx, params)
    assert rating.shape == (batch,)
    # bf16 storage / approx-reciprocal sigmoid vs f32 reference -> loose tol.
    assert jnp.allclose(rating, ref, atol=2e-2, rtol=2e-2)

    print("KERNEL_OK")
</pallas_src>

<mosaic_0001>
module attributes {stable_mosaic.version = 11 : i64} {
  func.func @_neumf_kernel(%arg0: i32, %arg1: memref<8x128xbf16, #tpu.memory_space<vmem>>, %arg2: memref<8x128xbf16, #tpu.memory_space<vmem>>, %arg3: memref<8x128xbf16, #tpu.memory_space<vmem>>, %arg4: memref<8x128xbf16, #tpu.memory_space<vmem>>, %arg5: memref<32x8xbf16, #tpu.memory_space<vmem>>, %arg6: memref<32x8xbf16, #tpu.memory_space<vmem>>, %arg7: memref<32x1xf32, #tpu.memory_space<vmem>>, %arg8: memref<16x32xbf16, #tpu.memory_space<vmem>>, %arg9: memref<16x1xf32, #tpu.memory_space<vmem>>, %arg10: memref<8x16xbf16, #tpu.memory_space<vmem>>, %arg11: memref<8x1xf32, #tpu.memory_space<vmem>>, %arg12: memref<1x8xbf16, #tpu.memory_space<vmem>>, %arg13: memref<1x8xbf16, #tpu.memory_space<vmem>>, %arg14: memref<1x1xf32, #tpu.memory_space<vmem>>, %arg15: memref<1x128xf32, #tpu.memory_space<vmem>>) attributes {dimension_semantics = [#tpu.dimension_semantics<parallel>], iteration_bounds = array<i64: 1>, scalar_prefetch = 0 : i64, scratch_operands = 0 : i64, tpu.core_type = #tpu.core_type<tc>, window_params = [{transform_indices = @transform_0, window_bounds = array<i64: 8, 128>}, {transform_indices = @transform_1, window_bounds = array<i64: 8, 128>}, {transform_indices = @transform_2, window_bounds = array<i64: 8, 128>}, {transform_indices = @transform_3, window_bounds = array<i64: 8, 128>}, {pipeline_mode = #tpu.pipeline_mode<synchronous>, transform_indices = @transform_4, window_bounds = array<i64: 32, 8>}, {pipeline_mode = #tpu.pipeline_mode<synchronous>, transform_indices = @transform_5, window_bounds = array<i64: 32, 8>}, {pipeline_mode = #tpu.pipeline_mode<synchronous>, transform_indices = @transform_6, window_bounds = array<i64: 32, 1>}, {pipeline_mode = #tpu.pipeline_mode<synchronous>, transform_indices = @transform_7, window_bounds = array<i64: 16, 32>}, {pipeline_mode = #tpu.pipeline_mode<synchronous>, transform_indices = @transform_8, window_bounds = array<i64: 16, 1>}, {pipeline_mode = #tpu.pipeline_mode<synchronous>, transform_indices = @transform_9, window_bounds = array<i64: 8, 16>}, {pipeline_mode = #tpu.pipeline_mode<synchronous>, transform_indices = @transform_10, window_bounds = array<i64: 8, 1>}, {pipeline_mode = #tpu.pipeline_mode<synchronous>, transform_indices = @transform_11, window_bounds = array<i64: 1, 8>}, {pipeline_mode = #tpu.pipeline_mode<synchronous>, transform_indices = @transform_12, window_bounds = array<i64: 1, 8>}, {pipeline_mode = #tpu.pipeline_mode<synchronous>, transform_indices = @transform_13, window_bounds = array<i64: 1, 1>}, {transform_indices = @transform_14, window_bounds = array<i64: 1, 128>}]} {
    %c0 = arith.constant 0 : index
    %c0_0 = arith.constant 0 : index
    %0 = vector.load %arg1[%c0, %c0_0] : memref<8x128xbf16, #tpu.memory_space<vmem>>, vector<8x128xbf16>
    %c0_1 = arith.constant 0 : index
    %c0_2 = arith.constant 0 : index
    %1 = vector.load %arg2[%c0_1, %c0_2] : memref<8x128xbf16, #tpu.memory_space<vmem>>, vector<8x128xbf16>
    %c0_3 = arith.constant 0 : index
    %c0_4 = arith.constant 0 : index
    %2 = vector.load %arg3[%c0_3, %c0_4] : memref<8x128xbf16, #tpu.memory_space<vmem>>, vector<8x128xbf16>
    %3 = arith.extf %2 : vector<8x128xbf16> to vector<8x128xf32>
    %c0_5 = arith.constant 0 : index
    %c0_6 = arith.constant 0 : index
    %4 = vector.load %arg4[%c0_5, %c0_6] : memref<8x128xbf16, #tpu.memory_space<vmem>>, vector<8x128xbf16>
    %5 = arith.extf %4 : vector<8x128xbf16> to vector<8x128xf32>
    %c0_7 = arith.constant 0 : index
    %c0_8 = arith.constant 0 : index
    %6 = vector.load %arg5[%c0_7, %c0_8] : memref<32x8xbf16, #tpu.memory_space<vmem>>, vector<32x8xbf16>
    %c0_9 = arith.constant 0 : index
    %c0_10 = arith.constant 0 : index
    %7 = vector.load %arg6[%c0_9, %c0_10] : memref<32x8xbf16, #tpu.memory_space<vmem>>, vector<32x8xbf16>
    %c0_11 = arith.constant 0 : index
    %c0_12 = arith.constant 0 : index
    %8 = vector.load %arg7[%c0_11, %c0_12] : memref<32x1xf32, #tpu.memory_space<vmem>>, vector<32x1xf32>
    %cst = arith.constant dense<0.000000e+00> : vector<32x128xf32>
    %9 = tpu.matmul %6, %0, %cst {dimension_numbers = #tpu.dot_dimension_numbers<[1], [0], [0], [1], [0, 0, 1, 1], [], []>} : vector<32x8xbf16>, vector<8x128xbf16>, vector<32x128xf32> -> vector<32x128xf32>
    %cst_13 = arith.constant dense<0.000000e+00> : vector<32x128xf32>
    %10 = tpu.matmul %7, %1, %cst_13 {dimension_numbers = #tpu.dot_dimension_numbers<[1], [0], [0], [1], [0, 0, 1, 1], [], []>} : vector<32x8xbf16>, vector<8x128xbf16>, vector<32x128xf32> -> vector<32x128xf32>
    %11 = arith.addf %9, %10 : vector<32x128xf32>
    %12 = vector.broadcast %8 : vector<32x1xf32> to vector<32x128xf32>
    %13 = arith.addf %11, %12 : vector<32x128xf32>
    %cst_14 = arith.constant 0.000000e+00 : f32
    %14 = vector.broadcast %cst_14 : f32 to vector<32x128xf32>
    %15 = arith.maximumf %13, %14 : vector<32x128xf32>
    %c0_15 = arith.constant 0 : index
    %c0_16 = arith.constant 0 : index
    %16 = vector.load %arg8[%c0_15, %c0_16] : memref<16x32xbf16, #tpu.memory_space<vmem>>, vector<16x32xbf16>
    %c0_17 = arith.constant 0 : index
    %c0_18 = arith.constant 0 : index
    %17 = vector.load %arg9[%c0_17, %c0_18] : memref<16x1xf32, #tpu.memory_space<vmem>>, vector<16x1xf32>
    %18 = arith.truncf %15 : vector<32x128xf32> to vector<32x128xbf16>
    %cst_19 = arith.constant dense<0.000000e+00> : vector<16x128xf32>
    %19 = tpu.matmul %16, %18, %cst_19 {dimension_numbers = #tpu.dot_dimension_numbers<[1], [0], [0], [1], [0, 0, 1, 1], [], []>} : vector<16x32xbf16>, vector<32x128xbf16>, vector<16x128xf32> -> vector<16x128xf32>
    %20 = vector.broadcast %17 : vector<16x1xf32> to vector<16x128xf32>
    %21 = arith.addf %19, %20 : vector<16x128xf32>
    %cst_20 = arith.constant 0.000000e+00 : f32
    %22 = vector.broadcast %cst_20 : f32 to vector<16x128xf32>
    %23 = arith.maximumf %21, %22 : vector<16x128xf32>
    %c0_21 = arith.constant 0 : index
    %c0_22 = arith.constant 0 : index
    %24 = vector.load %arg10[%c0_21, %c0_22] : memref<8x16xbf16, #tpu.memory_space<vmem>>, vector<8x16xbf16>
    %c0_23 = arith.constant 0 : index
    %c0_24 = arith.constant 0 : index
    %25 = vector.load %arg11[%c0_23, %c0_24] : memref<8x1xf32, #tpu.memory_space<vmem>>, vector<8x1xf32>
    %26 = arith.truncf %23 : vector<16x128xf32> to vector<16x128xbf16>
    %cst_25 = arith.constant dense<0.000000e+00> : vector<8x128xf32>
    %27 = tpu.matmul %24, %26, %cst_25 {dimension_numbers = #tpu.dot_dimension_numbers<[1], [0], [0], [1], [0, 0, 1, 1], [], []>} : vector<8x16xbf16>, vector<16x128xbf16>, vector<8x128xf32> -> vector<8x128xf32>
    %28 = vector.broadcast %25 : vector<8x1xf32> to vector<8x128xf32>
    %29 = arith.addf %27, %28 : vector<8x128xf32>
    %cst_26 = arith.constant 0.000000e+00 : f32
    %30 = vector.broadcast %cst_26 : f32 to vector<8x128xf32>
    %31 = arith.maximumf %29, %30 : vector<8x128xf32>
    %c0_27 = arith.constant 0 : index
    %c0_28 = arith.constant 0 : index
    %32 = vector.load %arg12[%c0_27, %c0_28] : memref<1x8xbf16, #tpu.memory_space<vmem>>, vector<1x8xbf16>
    %c0_29 = arith.constant 0 : index
    %c0_30 = arith.constant 0 : index
    %33 = vector.load %arg13[%c0_29, %c0_30] : memref<1x8xbf16, #tpu.memory_space<vmem>>, vector<1x8xbf16>
    %c0_31 = arith.constant 0 : index
    %c0_32 = arith.constant 0 : index
    %34 = vector.load %arg14[%c0_31, %c0_32] : memref<1x1xf32, #tpu.memory_space<vmem>>, vector<1x1xf32>
    %35 = arith.mulf %3, %5 : vector<8x128xf32>
    %36 = arith.truncf %31 : vector<8x128xf32> to vector<8x128xbf16>
    %cst_33 = arith.constant dense<0.000000e+00> : vector<1x128xf32>
    %37 = tpu.matmul %32, %36, %cst_33 {dimension_numbers = #tpu.dot_dimension_numbers<[1], [0], [0], [1], [0, 0, 1, 1], [], []>} : vector<1x8xbf16>, vector<8x128xbf16>, vector<1x128xf32> -> vector<1x128xf32>
    %38 = arith.truncf %35 : vector<8x128xf32> to vector<8x128xbf16>
    %cst_34 = arith.constant dense<0.000000e+00> : vector<1x128xf32>
    %39 = tpu.matmul %33, %38, %cst_34 {dimension_numbers = #tpu.dot_dimension_numbers<[1], [0], [0], [1], [0, 0, 1, 1], [], []>} : vector<1x8xbf16>, vector<8x128xbf16>, vector<1x128xf32> -> vector<1x128xf32>
    %40 = arith.addf %37, %39 : vector<1x128xf32>
    %41 = vector.broadcast %34 : vector<1x1xf32> to vector<1x128xf32>
    %42 = arith.addf %40, %41 : vector<1x128xf32>
    %cst_35 = arith.constant 0.000000e+00 : f32
    %43 = vector.broadcast %cst_35 : f32 to vector<1x128xf32>
    %44 = arith.subf %43, %42 : vector<1x128xf32>
    %45 = math.exp %44 : vector<1x128xf32>
    %cst_36 = arith.constant 1.000000e+00 : f32
    %46 = vector.broadcast %cst_36 : f32 to vector<1x128xf32>
    %47 = arith.addf %46, %45 : vector<1x128xf32>
    %48 = tpu.reciprocal %47 {approx = true} : vector<1x128xf32> -> vector<1x128xf32>
    %c0_37 = arith.constant 0 : index
    %c0_38 = arith.constant 0 : index
    %49 = vector.load %arg15[%c0_37, %c0_38] : memref<1x128xf32, #tpu.memory_space<vmem>>, vector<1x128xf32>
    tpu.vector_store %arg15[%c0_37, %c0_38], %48 {strides = array<i32>} : memref<1x128xf32, #tpu.memory_space<vmem>>, vector<1x128xf32>,
    return
  }
  func.func @transform_0(%arg0: i32) -> (i32, i32) {
    %c0_i32 = arith.constant 0 : i32
    %c0_i32_0 = arith.constant 0 : i32
    return %c0_i32, %arg0 : i32, i32
  }
  func.func @transform_1(%arg0: i32) -> (i32, i32) {
    %c0_i32 = arith.constant 0 : i32
    %c0_i32_0 = arith.constant 0 : i32
    return %c0_i32, %arg0 : i32, i32
  }
  func.func @transform_2(%arg0: i32) -> (i32, i32) {
    %c0_i32 = arith.constant 0 : i32
    %c0_i32_0 = arith.constant 0 : i32
    return %c0_i32, %arg0 : i32, i32
  }
  func.func @transform_3(%arg0: i32) -> (i32, i32) {
    %c0_i32 = arith.constant 0 : i32
    %c0_i32_0 = arith.constant 0 : i32
    return %c0_i32, %arg0 : i32, i32
  }
  func.func @transform_4(%arg0: i32) -> (i32, i32) {
    %c0_i32 = arith.constant 0 : i32
    %c0_i32_0 = arith.constant 0 : i32
    %c0_i32_1 = arith.constant 0 : i32
    return %c0_i32, %c0_i32_0 : i32, i32
  }
  func.func @transform_5(%arg0: i32) -> (i32, i32) {
    %c0_i32 = arith.constant 0 : i32
    %c0_i32_0 = arith.constant 0 : i32
    %c0_i32_1 = arith.constant 0 : i32
    return %c0_i32, %c0_i32_0 : i32, i32
  }
  func.func @transform_6(%arg0: i32) -> (i32, i32) {
    %c0_i32 = arith.constant 0 : i32
    %c0_i32_0 = arith.constant 0 : i32
    %c0_i32_1 = arith.constant 0 : i32
    return %c0_i32, %c0_i32_0 : i32, i32
  }
  func.func @transform_7(%arg0: i32) -> (i32, i32) {
    %c0_i32 = arith.constant 0 : i32
    %c0_i32_0 = arith.constant 0 : i32
    %c0_i32_1 = arith.constant 0 : i32
    return %c0_i32, %c0_i32_0 : i32, i32
  }
  func.func @transform_8(%arg0: i32) -> (i32, i32) {
    %c0_i32 = arith.constant 0 : i32
    %c0_i32_0 = arith.constant 0 : i32
    %c0_i32_1 = arith.constant 0 : i32
    return %c0_i32, %c0_i32_0 : i32, i32
  }
  func.func @transform_9(%arg0: i32) -> (i32, i32) {
    %c0_i32 = arith.constant 0 : i32
    %c0_i32_0 = arith.constant 0 : i32
    %c0_i32_1 = arith.constant 0 : i32
    return %c0_i32, %c0_i32_0 : i32, i32
  }
  func.func @transform_10(%arg0: i32) -> (i32, i32) {
    %c0_i32 = arith.constant 0 : i32
    %c0_i32_0 = arith.constant 0 : i32
    %c0_i32_1 = arith.constant 0 : i32
    return %c0_i32, %c0_i32_0 : i32, i32
  }
  func.func @transform_11(%arg0: i32) -> (i32, i32) {
    %c0_i32 = arith.constant 0 : i32
    %c0_i32_0 = arith.constant 0 : i32
    %c0_i32_1 = arith.constant 0 : i32
    return %c0_i32, %c0_i32_0 : i32, i32
  }
  func.func @transform_12(%arg0: i32) -> (i32, i32) {
    %c0_i32 = arith.constant 0 : i32
    %c0_i32_0 = arith.constant 0 : i32
    %c0_i32_1 = arith.constant 0 : i32
    return %c0_i32, %c0_i32_0 : i32, i32
  }
  func.func @transform_13(%arg0: i32) -> (i32, i32) {
    %c0_i32 = arith.constant 0 : i32
    %c0_i32_0 = arith.constant 0 : i32
    %c0_i32_1 = arith.constant 0 : i32
    return %c0_i32, %c0_i32_0 : i32, i32
  }
  func.func @transform_14(%arg0: i32) -> (i32, i32) {
    %c0_i32 = arith.constant 0 : i32
    %c0_i32_0 = arith.constant 0 : i32
    return %c0_i32, %arg0 : i32, i32
  }
}

</mosaic_0001>

<llo_original>
// kernel: tpu_custom_call.1
$region0: #{tpu_custom_call.1}
  #allocation0 [shape = 'u32[]', space=smem, size = 0x4, offset = 0x4, fixed_abs, tag = 'smem constant byte address 0x4 - core index']
  #allocation1 [shape = 'u32[144,128]{1,0:T(1,128)}', space=vmem, size = 0x12000, scoped, tag = 'internal scratch']
  #allocation2 [shape = 'f32[1,1]{1,0:T(1,128)S(1)}', space=vmem, size = 0x200, scoped, tag = 'scoped memory for tpu_custom_call.1']
  %s0 = inlined_call_operand.vmem [shape: bf16[8,128], index: 0, kind: input, shape index: {}]
  %s1 = inlined_call_operand.vmem [shape: bf16[8,128], index: 1, kind: input, shape index: {}]
  %s2 = inlined_call_operand.vmem [shape: bf16[8,128], index: 2, kind: input, shape index: {}]
  %s3 = inlined_call_operand.vmem [shape: bf16[8,128], index: 3, kind: input, shape index: {}]
  %s4 = inlined_call_operand.vmem [shape: bf16[32,8], index: 4, kind: input, shape index: {}]
  %s5 = inlined_call_operand.vmem [shape: bf16[32,8], index: 5, kind: input, shape index: {}]
  %s6 = inlined_call_operand.vmem [shape: f32[32,1], index: 6, kind: input, shape index: {}]
  %s7 = inlined_call_operand.vmem [shape: bf16[16,32], index: 7, kind: input, shape index: {}]
  %s8 = inlined_call_operand.vmem [shape: f32[16,1], index: 8, kind: input, shape index: {}]
  %s9 = inlined_call_operand.vmem [shape: bf16[8,16], index: 9, kind: input, shape index: {}]
  %s10 = inlined_call_operand.vmem [shape: f32[8,1], index: 10, kind: input, shape index: {}]
  %s11 = inlined_call_operand.vmem [shape: bf16[1,8], index: 11, kind: input, shape index: {}]
  %s12 = inlined_call_operand.vmem [shape: bf16[1,8], index: 12, kind: input, shape index: {}]
  %s13 = inlined_call_operand.<no memory space> [shape: f32[1,1], index: 13, kind: input, shape index: {}]
  %s14 = inlined_call_operand.hbm [shape: f32[1,128], index: 14, kind: output, shape index: {}]
  %s15 = sld [smem:[#allocation0]]
  $region66: #{tpu_custom_call.1} parent=0
    _
  %s17 = ssub.s32 1, %s15
  %s18 = scalar_select 0, %s17, %s15
  %v19 = vstv %s13
  %20 = vst [vmem:[#allocation2] sm:$0x1] %v19
  $region1: #{tpu_custom_call.1} parent=0
    #allocation3 [shape = 'u8[512]{0}', space=vmem, size = 0x400, scoped, tag = 'output window, operand 0, single buffered']
    #allocation4 [shape = 's32[1]{0}', space=sflag, size = 0x4, scoped, tag = 'scoped memory for tpu_custom_call.1']
    %21 = vsyncpa [#allocation4], 0
    // Predicated region
    $region2: #{tpu_custom_call.1} parent=1 // pred_check
      _
    $region3: #{tpu_custom_call.1} parent=1 // pred_check_branch
      %23 = sbr.rel (0) target = $region5
    $region4: #{tpu_custom_call.1} parent=1 // pred_region
      _
    $region5: #{tpu_custom_call.1} parent=1 // pred_fallthru
      _
    // Predicated region
    $region6: #{tpu_custom_call.1} parent=1 // pred_check
      _
    $region7: #{tpu_custom_call.1} parent=1 // pred_check_branch
      %25 = sbr.rel (0) target = $region9
    $region8: #{tpu_custom_call.1} parent=1 // pred_region
      _
    $region9: #{tpu_custom_call.1} parent=1 // pred_fallthru
      _
    // Predicated region
    $region10: #{tpu_custom_call.1} parent=1 // pred_check
      _
    $region11: #{tpu_custom_call.1} parent=1 // pred_check_branch
      %27 = sbr.rel (0) target = $region13
    $region12: #{tpu_custom_call.1} parent=1 // pred_region
      _
    $region13: #{tpu_custom_call.1} parent=1 // pred_fallthru
      _
    // Predicated region
    $region14: #{tpu_custom_call.1} parent=1 // pred_check
      _
    $region15: #{tpu_custom_call.1} parent=1 // pred_check_branch
      %29 = sbr.rel (0) target = $region17
    $region16: #{tpu_custom_call.1} parent=1 // pred_region
      _
    $region17: #{tpu_custom_call.1} parent=1 // pred_fallthru
      _
    // Predicated region
    $region18: #{tpu_custom_call.1} parent=1 // pred_check
      _
    $region19: #{tpu_custom_call.1} parent=1 // pred_check_branch
      %31 = sbr.rel (0) target = $region21
    $region20: #{tpu_custom_call.1} parent=1 // pred_region
      _
    $region21: #{tpu_custom_call.1} parent=1 // pred_fallthru
      _
    // Predicated region
    $region22: #{tpu_custom_call.1} parent=1 // pred_check
      _
    $region23: #{tpu_custom_call.1} parent=1 // pred_check_branch
      %33 = sbr.rel (0) target = $region25
    $region24: #{tpu_custom_call.1} parent=1 // pred_region
      _
    $region25: #{tpu_custom_call.1} parent=1 // pred_fallthru
      _
    // Predicated region
    $region26: #{tpu_custom_call.1} parent=1 // pred_check
      _
    $region27: #{tpu_custom_call.1} parent=1 // pred_check_branch
      %35 = sbr.rel (0) target = $region29
    $region28: #{tpu_custom_call.1} parent=1 // pred_region
      _
    $region29: #{tpu_custom_call.1} parent=1 // pred_fallthru
      _
    // Predicated region
    $region30: #{tpu_custom_call.1} parent=1 // pred_check
      _
    $region31: #{tpu_custom_call.1} parent=1 // pred_check_branch
      %37 = sbr.rel (0) target = $region33
    $region32: #{tpu_custom_call.1} parent=1 // pred_region
      _
    $region33: #{tpu_custom_call.1} parent=1 // pred_fallthru
      _
    // Predicated region
    $region34: #{tpu_custom_call.1} parent=1 // pred_check
      _
    $region35: #{tpu_custom_call.1} parent=1 // pred_check_branch
      %39 = sbr.rel (0) target = $region37
    $region36: #{tpu_custom_call.1} parent=1 // pred_region
      _
    $region37: #{tpu_custom_call.1} parent=1 // pred_fallthru
      _
    // Predicated region
    $region38: #{tpu_custom_call.1} parent=1 // pred_check
      _
    $region39: #{tpu_custom_call.1} parent=1 // pred_check_branch
      %41 = sbr.rel (0) target = $region41
    $region40: #{tpu_custom_call.1} parent=1 // pred_region
      _
    $region41: #{tpu_custom_call.1} parent=1 // pred_fallthru
      _
    // Predicated region
    $region42: #{tpu_custom_call.1} parent=1 // pred_check
      _
    $region43: #{tpu_custom_call.1} parent=1 // pred_check_branch
      %43 = sbr.rel (0) target = $region45
    $region44: #{tpu_custom_call.1} parent=1 // pred_region
      _
    $region45: #{tpu_custom_call.1} parent=1 // pred_fallthru
      _
    // Predicated region
    $region46: #{tpu_custom_call.1} parent=1 // pred_check
      _
    $region47: #{tpu_custom_call.1} parent=1 // pred_check_branch
      %45 = sbr.rel (0) target = $region49
    $region48: #{tpu_custom_call.1} parent=1 // pred_region
      _
    $region49: #{tpu_custom_call.1} parent=1 // pred_fallthru
      _
    // Predicated region
    $region50: #{tpu_custom_call.1} parent=1 // pred_check
      _
    $region51: #{tpu_custom_call.1} parent=1 // pred_check_branch
      %47 = sbr.rel (0) target = $region53
    $region52: #{tpu_custom_call.1} parent=1 // pred_region
      _
    $region53: #{tpu_custom_call.1} parent=1 // pred_fallthru
      _
    // Predicated region
    $region54: #{tpu_custom_call.1} parent=1 // pred_check
      _
    $region55: #{tpu_custom_call.1} parent=1 // pred_check_branch
      %49 = sbr.rel (0) target = $region57
    $region56: #{tpu_custom_call.1} parent=1 // pred_region
      _
    $region57: #{tpu_custom_call.1} parent=1 // pred_fallthru
      _
    %v51 = vld [vmem:[%s0] sm:$0xf]
    %v52 = vld [vmem:[%s1] sm:$0xf]
    %v53 = vld [vmem:[%s2] sm:$0xf]
    %v54 = vunpack.c.l.bf16 %v53
    %v55 = vld [vmem:[%s3] sm:$0xf]
    %v56 = vunpack.c.l.bf16 %v55
    %v57 = vld [vmem:[%s4] sm:$0xf]
    %v58 = vld [vmem:[%s4 + $0x4] sm:$0xf]
    %v59 = vld [vmem:[%s4 + $0x8] sm:$0xf]
    %v60 = vld [vmem:[%s4 + $0xc] sm:$0xf]
    %v61 = vld [vmem:[%s5] sm:$0xf]
    %v62 = vld [vmem:[%s5 + $0x4] sm:$0xf]
    %v63 = vld [vmem:[%s5 + $0x8] sm:$0xf]
    %v64 = vld [vmem:[%s5 + $0xc] sm:$0xf]
    %v65 = vld [vmem:[%s6] sm:$0xff]
    %v66 = vld [vmem:[%s6 + $0x8] sm:$0xff]
    %v67 = vld [vmem:[%s6 + $0x10] sm:$0xff]
    %v68 = vld [vmem:[%s6 + $0x18] sm:$0xff]
    %v73 = vunpack.c.l.b16 %v61
    %v74 = vunpack.c.l.b16 %v62
    %v75 = vunpack.c.l.b16 %v63
    %v76 = vunpack.c.l.b16 %v64
    %v77 = vpack.c.b16 %v74, %v73
    %v78 = vpack.c.b16 %v76, %v75
    %vm79 = vcmask 64512
    %v81 = vsel %vm79, %v77, 0
    %v84 = vsel %vm79, %v78, 0
    %vm86 = vcmask 1043456
    %v88 = vsel %vm86, %v52, 0
    %90 = vmatprep.subr.bf16.mxu0 0
    %91 = vmatpush1.bf16.msra.mxu0 %v88
    %92 = vmatprep.subr.bf16.mxu0 0
    %93 = vmatpush1.bf16.msra.mxu0 0
    %94 = vmatprep.subr.bf16.mxu0 0
    %95 = vmatpush1.bf16.msra.mxu0 0
    %96 = vmatprep.subr.bf16.mxu0 0
    %97 = vmatpush1.bf16.msra.mxu0 0
    %98 = vmatprep.subr.bf16.mxu0 0
    %99 = vmatpush1.bf16.msra.mxu0 0
    %100 = vmatprep.subr.bf16.mxu0 0
    %101 = vmatpush1.bf16.msra.mxu0 0
    %102 = vmatprep.subr.bf16.mxu0 0
    %103 = vmatpush1.bf16.msra.mxu0 0
    %104 = vmatprep.subr.bf16.mxu0 0
    %105 = vmatpush1.bf16.msra.mxu0 0
    %106 = vmatprep.subr.bf16.mxu0 0
    %107 = vmatpush1.bf16.msra.mxu0 0
    %108 = vmatprep.subr.bf16.mxu0 0
    %109 = vmatpush1.bf16.msra.mxu0 0
    %110 = vmatprep.subr.bf16.mxu0 0
    %111 = vmatpush1.bf16.msra.mxu0 0
    %112 = vmatprep.subr.bf16.mxu0 0
    %113 = vmatpush1.bf16.msra.mxu0 0
    %114 = vmatprep.subr.bf16.mxu0 0
    %115 = vmatpush1.bf16.msra.mxu0 0
    %116 = vmatprep.subr.bf16.mxu0 0
    %117 = vmatpush1.bf16.msra.mxu0 0
    %118 = vmatprep.subr.bf16.mxu0 0
    %119 = vmatpush1.bf16.msra.mxu0 0
    %120 = vmatprep.subr.bf16.mxu0 0
    %121 = vmatpush1.bf16.msra.mxu0 0
    %122 = vmatprep.mubr.bf16.mxu0 0
    %123 = vmatmul.mubr.bf16.gmra.mrb[0].mxu0 %v81
    %v124 = vpop.f32.mrb[0].mxu0
    %v125 = vadd.f32 0.0, %v124
    %v126 = vpop.f32.mrb[0].mxu0
    %v127 = vpop.f32.mrb[0].mxu0
    %v128 = vadd.f32 0.0, %v127
    %v129 = vpop.f32.mrb[0].mxu0
    %130 = vmatprep.mubr.bf16.mxu0 0
    %131 = vmatmul.mubr.bf16.gmra.mrb[0].mxu0 %v84
    %v132 = vpop.f32.mrb[0].mxu0
    %v133 = vadd.f32 0.0, %v132
    %v134 = vpop.f32.mrb[0].mxu0
    %v135 = vpop.f32.mrb[0].mxu0
    %v136 = vadd.f32 0.0, %v135
    %v137 = vpop.f32.mrb[0].mxu0
    %138 = vdwg.mxu0
    %v143 = vunpack.c.l.b16 %v57
    %v144 = vunpack.c.l.b16 %v58
    %v145 = vunpack.c.l.b16 %v59
    %v146 = vunpack.c.l.b16 %v60
    %v147 = vpack.c.b16 %v144, %v143
    %v148 = vpack.c.b16 %v146, %v145
    %v150 = vsel %vm79, %v147, 0
    %v153 = vsel %vm79, %v148, 0
    %v156 = vsel %vm86, %v51, 0
    %158 = vmatprep.subr.bf16.mxu0 0
    %159 = vmatpush1.bf16.msra.mxu0 %v156
    %160 = vmatprep.subr.bf16.mxu0 0
    %161 = vmatpush1.bf16.msra.mxu0 0
    %162 = vmatprep.subr.bf16.mxu0 0
    %163 = vmatpush1.bf16.msra.mxu0 0
    %164 = vmatprep.subr.bf16.mxu0 0
    %165 = vmatpush1.bf16.msra.mxu0 0
    %166 = vmatprep.subr.bf16.mxu0 0
    %167 = vmatpush1.bf16.msra.mxu0 0
    %168 = vmatprep.subr.bf16.mxu0 0
    %169 = vmatpush1.bf16.msra.mxu0 0
    %170 = vmatprep.subr.bf16.mxu0 0
    %171 = vmatpush1.bf16.msra.mxu0 0
    %172 = vmatprep.subr.bf16.mxu0 0
    %173 = vmatpush1.bf16.msra.mxu0 0
    %174 = vmatprep.subr.bf16.mxu0 0
    %175 = vmatpush1.bf16.msra.mxu0 0
    %176 = vmatprep.subr.bf16.mxu0 0
    %177 = vmatpush1.bf16.msra.mxu0 0
    %178 = vmatprep.subr.bf16.mxu0 0
    %179 = vmatpush1.bf16.msra.mxu0 0
    %180 = vmatprep.subr.bf16.mxu0 0
    %181 = vmatpush1.bf16.msra.mxu0 0
    %182 = vmatprep.subr.bf16.mxu0 0
    %183 = vmatpush1.bf16.msra.mxu0 0
    %184 = vmatprep.subr.bf16.mxu0 0
    %185 = vmatpush1.bf16.msra.mxu0 0
    %186 = vmatprep.subr.bf16.mxu0 0
    %187 = vmatpush1.bf16.msra.mxu0 0
    %188 = vmatprep.subr.bf16.mxu0 0
    %189 = vmatpush1.bf16.msra.mxu0 0
    %190 = vmatprep.mubr.bf16.mxu0 0
    %191 = vmatmul.mubr.bf16.gmra.mrb[0].mxu0 %v150
    %v192 = vpop.f32.mrb[0].mxu0
    %v193 = vadd.f32 %v125, %v192
    %v194 = vpop.f32.mrb[0].mxu0
    %v195 = vpop.f32.mrb[0].mxu0
    %v196 = vadd.f32 %v128, %v195
    %v197 = vpop.f32.mrb[0].mxu0
    %198 = vmatprep.mubr.bf16.mxu0 0
    %199 = vmatmul.mubr.bf16.gmra.mrb[0].mxu0 %v153
    %v200 = vpop.f32.mrb[0].mxu0
    %v201 = vadd.f32 %v133, %v200
    %v202 = vpop.f32.mrb[0].mxu0
    %v203 = vpop.f32.mrb[0].mxu0
    %v204 = vadd.f32 %v136, %v203
    %v205 = vpop.f32.mrb[0].mxu0
    %206 = vdwg.mxu0
    %208 = vset.pattern.permute.xlu0 0
    %209 = vperm.xlu0 %208, %v65
    %v210 = vpop.permute.xlu0 %209
    %213 = vset.pattern.permute.xlu0 0
    %214 = vperm.xlu0 %213, %v66
    %v215 = vpop.permute.xlu0 %214
    %218 = vset.pattern.permute.xlu0 0
    %219 = vperm.xlu0 %218, %v67
    %v220 = vpop.permute.xlu0 %219
    %223 = vset.pattern.permute.xlu0 0
    %224 = vperm.xlu0 %223, %v68
    %v225 = vpop.permute.xlu0 %224
    %v227 = vadd.f32 %v193, %v210
    %v228 = vadd.f32 %v196, %v215
    %v229 = vadd.f32 %v201, %v220
    %v230 = vadd.f32 %v204, %v225
    %v231 = vmax.f32 %v227, 0.0
    %v232 = vmax.f32 %v228, 0.0
    %v233 = vmax.f32 %v229, 0.0
    %v234 = vmax.f32 %v230, 0.0
    %v235 = vld [vmem:[%s7] sm:$0xf]
    %v236 = vld [vmem:[%s7 + $0x4] sm:$0xf]
    %v237 = vld [vmem:[%s8] sm:$0xff]
    %v238 = vld [vmem:[%s8 + $0x8] sm:$0xff]
    %v239 = vpack.c.bf16 %v232, %v231
    %v240 = vpack.c.bf16 %v234, %v233
    %242 = vset.pattern.permute.xlu0 0
    %243 = vperm.xlu0 %242, %v237
    %v244 = vpop.permute.xlu0 %243
    %247 = vset.pattern.permute.xlu0 0
    %248 = vperm.xlu0 %247, %v238
    %v249 = vpop.permute.xlu0 %248
    %v253 = vunpack.c.l.b16 %v235
    %v254 = vunpack.c.l.b16 %v236
    %v255 = vpack.c.b16 %v254, %v253
    %vm256 = vcmask 261120
    %v258 = vsel %vm256, %v255, 0
    %260 = vmatprep.subr.bf16.mxu0 0
    %261 = vmatpush1.bf16.msra.mxu0 %v239
    %262 = vmatprep.subr.bf16.mxu0 0
    %263 = vmatpush1.bf16.msra.mxu0 %v240
    %264 = vmatprep.subr.bf16.mxu0 0
    %265 = vmatpush1.bf16.msra.mxu0 0
    %266 = vmatprep.subr.bf16.mxu0 0
    %267 = vmatpush1.bf16.msra.mxu0 0
    %268 = vmatprep.subr.bf16.mxu0 0
    %269 = vmatpush1.bf16.msra.mxu0 0
    %270 = vmatprep.subr.bf16.mxu0 0
    %271 = vmatpush1.bf16.msra.mxu0 0
    %272 = vmatprep.subr.bf16.mxu0 0
    %273 = vmatpush1.bf16.msra.mxu0 0
    %274 = vmatprep.subr.bf16.mxu0 0
    %275 = vmatpush1.bf16.msra.mxu0 0
    %276 = vmatprep.subr.bf16.mxu0 0
    %277 = vmatpush1.bf16.msra.mxu0 0
    %278 = vmatprep.subr.bf16.mxu0 0
    %279 = vmatpush1.bf16.msra.mxu0 0
    %280 = vmatprep.subr.bf16.mxu0 0
    %281 = vmatpush1.bf16.msra.mxu0 0
    %282 = vmatprep.subr.bf16.mxu0 0
    %283 = vmatpush1.bf16.msra.mxu0 0
    %284 = vmatprep.subr.bf16.mxu0 0
    %285 = vmatpush1.bf16.msra.mxu0 0
    %286 = vmatprep.subr.bf16.mxu0 0
    %287 = vmatpush1.bf16.msra.mxu0 0
    %288 = vmatprep.subr.bf16.mxu0 0
    %289 = vmatpush1.bf16.msra.mxu0 0
    %290 = vmatprep.subr.bf16.mxu0 0
    %291 = vmatpush1.bf16.msra.mxu0 0
    %292 = vmatprep.mubr.bf16.mxu0 0
    %293 = vmatmul.mubr.bf16.gmra.mrb[0].mxu0 %v258
    %v294 = vpop.f32.mrb[0].mxu0
    %v295 = vadd.f32 %v244, %v294
    %v296 = vpop.f32.mrb[0].mxu0
    %v297 = vpop.f32.mrb[0].mxu0
    %v298 = vadd.f32 %v249, %v297
    %v299 = vpop.f32.mrb[0].mxu0
    %300 = vdwg.mxu0
    %v301 = vmax.f32 %v295, 0.0
    %v302 = vmax.f32 %v298, 0.0
    %v303 = vld [vmem:[%s9] sm:$0xf]
    %v304 = vld [vmem:[%s10] sm:$0xff]
    %v305 = vpack.c.bf16 %v302, %v301
    %307 = vset.pattern.permute.xlu0 0
    %308 = vperm.xlu0 %307, %v304
    %v309 = vpop.permute.xlu0 %308
    %vm311 = vcmask 130048
    %v313 = vsel %vm311, %v303, 0
    %315 = vmatprep.subr.bf16.mxu0 0
    %316 = vmatpush1.bf16.msra.mxu0 %v305
    %317 = vmatprep.subr.bf16.mxu0 0
    %318 = vmatpush1.bf16.msra.mxu0 0
    %319 = vmatprep.subr.bf16.mxu0 0
    %320 = vmatpush1.bf16.msra.mxu0 0
    %321 = vmatprep.subr.bf16.mxu0 0
    %322 = vmatpush1.bf16.msra.mxu0 0
    %323 = vmatprep.subr.bf16.mxu0 0
    %324 = vmatpush1.bf16.msra.mxu0 0
    %325 = vmatprep.subr.bf16.mxu0 0
    %326 = vmatpush1.bf16.msra.mxu0 0
    %327 = vmatprep.subr.bf16.mxu0 0
    %328 = vmatpush1.bf16.msra.mxu0 0
    %329 = vmatprep.subr.bf16.mxu0 0
    %330 = vmatpush1.bf16.msra.mxu0 0
    %331 = vmatprep.subr.bf16.mxu0 0
    %332 = vmatpush1.bf16.msra.mxu0 0
    %333 = vmatprep.subr.bf16.mxu0 0
    %334 = vmatpush1.bf16.msra.mxu0 0
    %335 = vmatprep.subr.bf16.mxu0 0
    %336 = vmatpush1.bf16.msra.mxu0 0
    %337 = vmatprep.subr.bf16.mxu0 0
    %338 = vmatpush1.bf16.msra.mxu0 0
    %339 = vmatprep.subr.bf16.mxu0 0
    %340 = vmatpush1.bf16.msra.mxu0 0
    %341 = vmatprep.subr.bf16.mxu0 0
    %342 = vmatpush1.bf16.msra.mxu0 0
    %343 = vmatprep.subr.bf16.mxu0 0
    %344 = vmatpush1.bf16.msra.mxu0 0
    %345 = vmatprep.subr.bf16.mxu0 0
    %346 = vmatpush1.bf16.msra.mxu0 0
    %347 = vmatprep.mubr.bf16.mxu0 0
    %348 = vmatmul.mubr.bf16.gmra.mrb[0].mxu0 %v313
    %v349 = vpop.f32.mrb[0].mxu0
    %v350 = vadd.f32 %v309, %v349
    %v351 = vpop.f32.mrb[0].mxu0
    %v352 = vpop.f32.mrb[0].mxu0
    %v353 = vpop.f32.mrb[0].mxu0
    %354 = vdwg.mxu0
    %v355 = vmax.f32 %v350, 0.0
    %v356 = vld [vmem:[%s11] sm:$0x1]
    %v357 = vld [vmem:[%s12] sm:$0x1]
    %v358 = vld [vmem:[#allocation2] sm:$0x1]
    %v359 = vmul.f32 %v54, %v56
    %v360 = vpack.c.bf16 %v355, %v355
    %v361 = vpack.c.bf16 %v359, %v359
    %v363 = vsel %vm79, %v357, 0
    %v366 = vsel %vm86, %v361, 0
    %368 = vmatprep.subr.bf16.mxu0 0
    %369 = vmatpush1.bf16.msra.mxu0 %v366
    %370 = vmatprep.subr.bf16.mxu0 0
    %371 = vmatpush1.bf16.msra.mxu0 0
    %372 = vmatprep.subr.bf16.mxu0 0
    %373 = vmatpush1.bf16.msra.mxu0 0
    %374 = vmatprep.subr.bf16.mxu0 0
    %375 = vmatpush1.bf16.msra.mxu0 0
    %376 = vmatprep.subr.bf16.mxu0 0
    %377 = vmatpush1.bf16.msra.mxu0 0
    %378 = vmatprep.subr.bf16.mxu0 0
    %379 = vmatpush1.bf16.msra.mxu0 0
    %380 = vmatprep.subr.bf16.mxu0 0
    %381 = vmatpush1.bf16.msra.mxu0 0
    %382 = vmatprep.subr.bf16.mxu0 0
    %383 = vmatpush1.bf16.msra.mxu0 0
    %384 = vmatprep.subr.bf16.mxu0 0
    %385 = vmatpush1.bf16.msra.mxu0 0
    %386 = vmatprep.subr.bf16.mxu0 0
    %387 = vmatpush1.bf16.msra.mxu0 0
    %388 = vmatprep.subr.bf16.mxu0 0
    %389 = vmatpush1.bf16.msra.mxu0 0
    %390 = vmatprep.subr.bf16.mxu0 0
    %391 = vmatpush1.bf16.msra.mxu0 0
    %392 = vmatprep.subr.bf16.mxu0 0
    %393 = vmatpush1.bf16.msra.mxu0 0
    %394 = vmatprep.subr.bf16.mxu0 0
    %395 = vmatpush1.bf16.msra.mxu0 0
    %396 = vmatprep.subr.bf16.mxu0 0
    %397 = vmatpush1.bf16.msra.mxu0 0
    %398 = vmatprep.subr.bf16.mxu0 0
    %399 = vmatpush1.bf16.msra.mxu0 0
    %400 = vmatprep.mubr.bf16.mxu0 0
    %401 = vmatmul.mubr.bf16.gmra.mrb[0].mxu0 %v363
    %v402 = vpop.f32.mrb[0].mxu0
    %v403 = vadd.f32 0.0, %v402
    %v404 = vpop.f32.mrb[0].mxu0
    %v405 = vpop.f32.mrb[0].mxu0
    %v406 = vpop.f32.mrb[0].mxu0
    %407 = vdwg.mxu0
    %v409 = vsel %vm79, %v356, 0
    %v412 = vsel %vm86, %v360, 0
    %414 = vmatprep.subr.bf16.mxu0 0
    %415 = vmatpush1.bf16.msra.mxu0 %v412
    %416 = vmatprep.subr.bf16.mxu0 0
    %417 = vmatpush1.bf16.msra.mxu0 0
    %418 = vmatprep.subr.bf16.mxu0 0
    %419 = vmatpush1.bf16.msra.mxu0 0
    %420 = vmatprep.subr.bf16.mxu0 0
    %421 = vmatpush1.bf16.msra.mxu0 0
    %422 = vmatprep.subr.bf16.mxu0 0
    %423 = vmatpush1.bf16.msra.mxu0 0
    %424 = vmatprep.subr.bf16.mxu0 0
    %425 = vmatpush1.bf16.msra.mxu0 0
    %426 = vmatprep.subr.bf16.mxu0 0
    %427 = vmatpush1.bf16.msra.mxu0 0
    %428 = vmatprep.subr.bf16.mxu0 0
    %429 = vmatpush1.bf16.msra.mxu0 0
    %430 = vmatprep.subr.bf16.mxu0 0
    %431 = vmatpush1.bf16.msra.mxu0 0
    %432 = vmatprep.subr.bf16.mxu0 0
    %433 = vmatpush1.bf16.msra.mxu0 0
    %434 = vmatprep.subr.bf16.mxu0 0
    %435 = vmatpush1.bf16.msra.mxu0 0
    %436 = vmatprep.subr.bf16.mxu0 0
    %437 = vmatpush1.bf16.msra.mxu0 0
    %438 = vmatprep.subr.bf16.mxu0 0
    %439 = vmatpush1.bf16.msra.mxu0 0
    %440 = vmatprep.subr.bf16.mxu0 0
    %441 = vmatpush1.bf16.msra.mxu0 0
    %442 = vmatprep.subr.bf16.mxu0 0
    %443 = vmatpush1.bf16.msra.mxu0 0
    %444 = vmatprep.subr.bf16.mxu0 0
    %445 = vmatpush1.bf16.msra.mxu0 0
    %446 = vmatprep.mubr.bf16.mxu0 0
    %447 = vmatmul.mubr.bf16.gmra.mrb[0].mxu0 %v409
    %v448 = vpop.f32.mrb[0].mxu0
    %v449 = vadd.f32 %v403, %v448
    %v450 = vpop.f32.mrb[0].mxu0
    %v451 = vpop.f32.mrb[0].mxu0
    %v452 = vpop.f32.mrb[0].mxu0
    %453 = vdwg.mxu0
    %455 = vset.pattern.permute.xlu0 0
    %456 = vperm.xlu0 %455, %v358
    %v457 = vpop.permute.xlu0 %456
    %v459 = vlaneseq
    %v460 = vshrl.u32 %v459, 7
    %v461 = vsub.s32 0, %v460
    %v462 = vrot.slane %v457, %v461
    %v463 = vadd.f32 %v449, %v462
    %v464 = vsub.f32 0.0, %v463
    %v465 = vmul.f32 %v464, 1.442695
    %v466 = vpow.pop %v465
    %v467 = vadd.f32 %v466, 1.0
    %v468 = vrcp.pop %v467
    %469 = vst [vmem:[#allocation3] sm:$0x1] %v468
    // Predicated region
    $region58: #{tpu_custom_call.1} parent=1 // pred_check
      _
    $region59: #{tpu_custom_call.1} parent=1 // pred_check_branch
      %471 = sbr.rel (0) target = $region61
    $region60: #{tpu_custom_call.1} parent=1 // pred_region
      %s473 = ssub.s32 16, 16
      %474 = vsyncadd [#allocation4], %s473
      %s476 = sshll.u32 [#allocation3], 4
      %s477 = int_to_ptr.vmem [resolvable:$true] %s476
      %479 = dma.vmem_to_hbm [thread:$0]  %s477, 16, %s14, [#allocation4]
    $region61: #{tpu_custom_call.1} parent=1 // pred_fallthru
      _
    // Predicated region
    $region62: #{tpu_custom_call.1} parent=1 // pred_check
      _
    $region63: #{tpu_custom_call.1} parent=1 // pred_check_branch
      %481 = sbr.rel (0) target = $region65
    $region64: #{tpu_custom_call.1} parent=1 // pred_region
      %482 = dma.done [#allocation4], 16
    $region65: #{tpu_custom_call.1} parent=1 // pred_fallthru
      _
    %483 = vsyncpa [#allocation4], 1

</llo_original>
